<compile_context>
chip_gen: v5e
topology: v5e:2x2
jax: 0.10.0
libtpu: 0.0.40
codegen_flags: <defaults>
</compile_context>

<pallas_src>
import math

import jax
import jax.numpy as jnp
from jax.experimental import pallas as pl
from jax.experimental.pallas import tpu as pltpu

FREQ_DIM = 512      # frequency_embedding_dim (even, so no zero-pad branch needed)
HIDDEN_DIM = 128    # hidden_dim
MAX_PERIOD = 10000
HALF = FREQ_DIM // 2
TB_MAX = 512        # max rows per grid step


def _round_up(x, m):
    return ((x + m - 1) // m) * m


def _timestep_embedding_kernel(t_ref, freqs_ref, w1c_ref, w1s_ref, b1_ref,
                               w2_ref, b2_ref, out_ref):
    wdt = w1c_ref.dtype   # bf16 (default fast path) or f32 (exact mode)

    # args = t * freqs, kept in f32 (range reduction must be f32 for args ~1e3).
    args = t_ref[...] * freqs_ref[...]                      # (tb, HALF) f32

    # sin/cos in f32; bf16 downcast fused into the same expression so the
    # (tb, HALF) panels are touched exactly once.
    cos_part = jnp.cos(args).astype(wdt)
    sin_part = jnp.sin(args).astype(wdt)

    # First linear, split over the concat halves:
    #   concat([cos, sin]) @ W1t == cos @ W1t[:half] + sin @ W1t[half:]
    # Native (bf16 x bf16 -> f32) MXU matmuls; f32 accumulation.
    h = (jnp.dot(cos_part, w1c_ref[...], preferred_element_type=jnp.float32)
         + jnp.dot(sin_part, w1s_ref[...], preferred_element_type=jnp.float32)
         + b1_ref[...])

    # SiLU: x * sigmoid(x) == x * (0.5 * tanh(x/2) + 0.5)   (single EUP tanh)
    h = h * (0.5 * jnp.tanh(0.5 * h) + 0.5)

    # Second linear.
    out = jnp.dot(h.astype(wdt), w2_ref[...],
                  preferred_element_type=jnp.float32) + b2_ref[...]
    out_ref[...] = out.astype(out_ref.dtype)


def timestep_embedding_forward(timesteps, w1_t, b1, w2_t, b2, *,
                               use_bf16_weights=True):
    """timesteps: (B,) float array -> (B, HIDDEN_DIM) float32 embedding."""
    B = timesteps.shape[0]
    t2d = timesteps.astype(jnp.float32).reshape(B, 1)

    wdt = jnp.bfloat16 if use_bf16_weights else jnp.float32
    w1c = w1_t[:HALF, :].astype(wdt)             # (256, 128) cos half
    w1s = w1_t[HALF:, :].astype(wdt)             # (256, 128) sin half
    w2b = w2_t.astype(wdt)                       # (128, 128)
    b1_2d = b1.reshape(1, HIDDEN_DIM).astype(jnp.float32)
    b2_2d = b2.reshape(1, HIDDEN_DIM).astype(jnp.float32)

    # Constant frequency table, hoisted out of the kernel (XLA constant-folds it).
    freqs = jnp.exp(
        -math.log(MAX_PERIOD) * jnp.arange(HALF, dtype=jnp.float32) / HALF
    ).reshape(1, HALF)

    # --- batch tiling -------------------------------------------------------
    B8 = _round_up(B, 8)
    if B8 <= TB_MAX:
        tb, nb, B_pad = B8, 1, B8
    else:
        # >= 4 parallel blocks (v7x megacore + per-step overhead amortization),
        # tile a multiple of 16 (bf16 sublane tile), capped at TB_MAX.
        tb = min(TB_MAX, max(128, _round_up(pl.cdiv(B8, 4), 16)))
        B_pad = _round_up(B8, tb)
        nb = B_pad // tb
    if B_pad != B:
        t2d = jnp.pad(t2d, ((0, B_pad - B), (0, 0)))

    wbytes = jnp.dtype(wdt).itemsize
    cost = pl.CostEstimate(
        flops=B_pad * 2 * (FREQ_DIM * HIDDEN_DIM + HIDDEN_DIM * HIDDEN_DIM),
        # per row: HALF cos + HALF sin + HIDDEN_DIM tanh
        transcendentals=B_pad * (FREQ_DIM + HIDDEN_DIM),
        bytes_accessed=(B_pad * 4 + B_pad * HIDDEN_DIM * 4
                        + (FREQ_DIM * HIDDEN_DIM + HIDDEN_DIM * HIDDEN_DIM) * wbytes
                        + (HALF + 2 * HIDDEN_DIM) * 4),
    )

    inputs = (t2d, freqs, w1c, w1s, b1_2d, w2b, b2_2d)
    out_shape = jax.ShapeDtypeStruct((B_pad, HIDDEN_DIM), jnp.float32)

    if nb == 1:
        # Small batch: single block, no grid -> no pipeline prologue and no
        # double-buffering of any input (everything is single-buffered).
        out = pl.pallas_call(
            _timestep_embedding_kernel,
            out_shape=out_shape,
            cost_estimate=cost,
        )(*inputs)
    else:
        # Resident operands: constant index map + single buffer (they never
        # change across grid steps, so a second buffer is wasted VMEM /
        # prologue DMAs).
        def _res(shape):
            return pl.BlockSpec(shape, lambda i: (0, 0),
                                pipeline_mode=pl.Buffered(1))

        out = pl.pallas_call(
            _timestep_embedding_kernel,
            out_shape=out_shape,
            grid=(nb,),
            in_specs=[
                pl.BlockSpec((tb, 1), lambda i: (i, 0)),      # t (streamed)
                _res((1, HALF)),                              # freqs
                _res((HALF, HIDDEN_DIM)),                     # w1 cos half
                _res((HALF, HIDDEN_DIM)),                     # w1 sin half
                _res((1, HIDDEN_DIM)),                        # b1
                _res((HIDDEN_DIM, HIDDEN_DIM)),               # w2
                _res((1, HIDDEN_DIM)),                        # b2
            ],
            out_specs=pl.BlockSpec((tb, HIDDEN_DIM), lambda i: (i, 0)),
            compiler_params=pltpu.CompilerParams(
                dimension_semantics=("parallel",)),
            cost_estimate=cost,
        )(*inputs)
    return out[:B]


def init_params(key):
    """Deterministic synthetic params matching torch Linear shapes (stored transposed)."""
    k1, k2, k3, k4 = jax.random.split(key, 4)
    lim1 = 1.0 / math.sqrt(FREQ_DIM)
    lim2 = 1.0 / math.sqrt(HIDDEN_DIM)
    w1_t = jax.random.uniform(k1, (FREQ_DIM, HIDDEN_DIM), jnp.float32, -lim1, lim1)
    b1 = jax.random.uniform(k2, (HIDDEN_DIM,), jnp.float32, -lim1, lim1)
    w2_t = jax.random.uniform(k3, (HIDDEN_DIM, HIDDEN_DIM), jnp.float32, -lim2, lim2)
    b2 = jax.random.uniform(k4, (HIDDEN_DIM,), jnp.float32, -lim2, lim2)
    return w1_t, b1, w2_t, b2


def reference_forward(timesteps, w1_t, b1, w2_t, b2):
    """Pure-JAX f32 reference mirroring the PyTorch module exactly."""
    freqs = jnp.exp(-math.log(MAX_PERIOD) * jnp.arange(HALF, dtype=jnp.float32) / HALF)
    args = timesteps.astype(jnp.float32)[:, None] * freqs[None, :]
    emb = jnp.concatenate([jnp.cos(args), jnp.sin(args)], axis=-1)
    h = jnp.dot(emb, w1_t, precision=jax.lax.Precision.HIGHEST) + b1
    h = h * jax.nn.sigmoid(h)
    return jnp.dot(h, w2_t, precision=jax.lax.Precision.HIGHEST) + b2


if __name__ == "__main__":
    key = jax.random.PRNGKey(0)
    pkey, tkey = jax.random.split(key)
    w1_t, b1, w2_t, b2 = init_params(pkey)

    B = 8
    timesteps = jax.random.uniform(tkey, (B,), jnp.float32, 0.0, 1000.0)
    ref = reference_forward(timesteps, w1_t, b1, w2_t, b2)

    # Default fast path: bf16 weights + bf16 MXU activations, f32 accumulation.
    out_bf16 = jax.block_until_ready(
        timestep_embedding_forward(timesteps, w1_t, b1, w2_t, b2))
    assert out_bf16.shape == (B, HIDDEN_DIM)
    err_bf16 = float(jnp.max(jnp.abs(out_bf16 - ref)))
    assert jnp.allclose(out_bf16, ref, atol=5e-3, rtol=5e-3), \
        f"bf16-mode max abs err {err_bf16}"

    # Exact mode: f32 weights end-to-end (parity with the torch module).
    out_f32 = jax.block_until_ready(
        timestep_embedding_forward(timesteps, w1_t, b1, w2_t, b2,
                                   use_bf16_weights=False))
    err_f32 = float(jnp.max(jnp.abs(out_f32 - ref)))
    assert jnp.allclose(out_f32, ref, atol=1e-3, rtol=1e-3), \
        f"f32-mode max abs err {err_f32}"

    print("KERNEL_OK")
</pallas_src>

<mosaic_0001>
module attributes {stable_mosaic.version = 11 : i64} {
  func.func @_timestep_embedding_kernel(%arg0: memref<8x1xf32, #tpu.memory_space<vmem>>, %arg1: memref<1x256xf32, #tpu.memory_space<vmem>>, %arg2: memref<256x128xbf16, #tpu.memory_space<vmem>>, %arg3: memref<256x128xbf16, #tpu.memory_space<vmem>>, %arg4: memref<1x128xf32, #tpu.memory_space<vmem>>, %arg5: memref<128x128xbf16, #tpu.memory_space<vmem>>, %arg6: memref<1x128xf32, #tpu.memory_space<vmem>>, %arg7: memref<8x128xf32, #tpu.memory_space<vmem>>) attributes {dimension_semantics = [], scalar_prefetch = 0 : i64, scratch_operands = 0 : i64, tpu.core_type = #tpu.core_type<tc>} {
    %c0 = arith.constant 0 : index
    %c0_0 = arith.constant 0 : index
    %0 = vector.load %arg0[%c0, %c0_0] : memref<8x1xf32, #tpu.memory_space<vmem>>, vector<8x1xf32>
    %c0_1 = arith.constant 0 : index
    %c0_2 = arith.constant 0 : index
    %1 = vector.load %arg1[%c0_1, %c0_2] : memref<1x256xf32, #tpu.memory_space<vmem>>, vector<1x256xf32>
    %2 = vector.broadcast %0 : vector<8x1xf32> to vector<8x256xf32>
    %3 = vector.broadcast %1 : vector<1x256xf32> to vector<8x256xf32>
    %4 = arith.mulf %2, %3 : vector<8x256xf32>
    %5 = math.cos %4 : vector<8x256xf32>
    %6 = arith.truncf %5 : vector<8x256xf32> to vector<8x256xbf16>
    %7 = math.sin %4 : vector<8x256xf32>
    %8 = arith.truncf %7 : vector<8x256xf32> to vector<8x256xbf16>
    %c0_3 = arith.constant 0 : index
    %c0_4 = arith.constant 0 : index
    %9 = vector.load %arg2[%c0_3, %c0_4] : memref<256x128xbf16, #tpu.memory_space<vmem>>, vector<256x128xbf16>
    %cst = arith.constant dense<0.000000e+00> : vector<8x128xf32>
    %10 = tpu.matmul %6, %9, %cst {dimension_numbers = #tpu.dot_dimension_numbers<[1], [0], [0], [1], [0, 0, 1, 1], [], []>} : vector<8x256xbf16>, vector<256x128xbf16>, vector<8x128xf32> -> vector<8x128xf32>
    %c0_5 = arith.constant 0 : index
    %c0_6 = arith.constant 0 : index
    %11 = vector.load %arg3[%c0_5, %c0_6] : memref<256x128xbf16, #tpu.memory_space<vmem>>, vector<256x128xbf16>
    %cst_7 = arith.constant dense<0.000000e+00> : vector<8x128xf32>
    %12 = tpu.matmul %8, %11, %cst_7 {dimension_numbers = #tpu.dot_dimension_numbers<[1], [0], [0], [1], [0, 0, 1, 1], [], []>} : vector<8x256xbf16>, vector<256x128xbf16>, vector<8x128xf32> -> vector<8x128xf32>
    %13 = arith.addf %10, %12 : vector<8x128xf32>
    %c0_8 = arith.constant 0 : index
    %c0_9 = arith.constant 0 : index
    %14 = vector.load %arg4[%c0_8, %c0_9] : memref<1x128xf32, #tpu.memory_space<vmem>>, vector<1x128xf32>
    %15 = vector.broadcast %14 : vector<1x128xf32> to vector<8x128xf32>
    %16 = arith.addf %13, %15 : vector<8x128xf32>
    %cst_10 = arith.constant 5.000000e-01 : f32
    %17 = vector.broadcast %cst_10 : f32 to vector<8x128xf32>
    %18 = arith.mulf %17, %16 : vector<8x128xf32>
    %19 = math.tanh %18 : vector<8x128xf32>
    %cst_11 = arith.constant 5.000000e-01 : f32
    %20 = vector.broadcast %cst_11 : f32 to vector<8x128xf32>
    %21 = arith.mulf %20, %19 : vector<8x128xf32>
    %cst_12 = arith.constant 5.000000e-01 : f32
    %22 = vector.broadcast %cst_12 : f32 to vector<8x128xf32>
    %23 = arith.addf %21, %22 : vector<8x128xf32>
    %24 = arith.mulf %16, %23 : vector<8x128xf32>
    %25 = arith.truncf %24 : vector<8x128xf32> to vector<8x128xbf16>
    %c0_13 = arith.constant 0 : index
    %c0_14 = arith.constant 0 : index
    %26 = vector.load %arg5[%c0_13, %c0_14] : memref<128x128xbf16, #tpu.memory_space<vmem>>, vector<128x128xbf16>
    %cst_15 = arith.constant dense<0.000000e+00> : vector<8x128xf32>
    %27 = tpu.matmul %25, %26, %cst_15 {dimension_numbers = #tpu.dot_dimension_numbers<[1], [0], [0], [1], [0, 0, 1, 1], [], []>} : vector<8x128xbf16>, vector<128x128xbf16>, vector<8x128xf32> -> vector<8x128xf32>
    %c0_16 = arith.constant 0 : index
    %c0_17 = arith.constant 0 : index
    %28 = vector.load %arg6[%c0_16, %c0_17] : memref<1x128xf32, #tpu.memory_space<vmem>>, vector<1x128xf32>
    %29 = vector.broadcast %28 : vector<1x128xf32> to vector<8x128xf32>
    %30 = arith.addf %27, %29 : vector<8x128xf32>
    %c0_18 = arith.constant 0 : index
    %c0_19 = arith.constant 0 : index
    %31 = vector.load %arg7[%c0_18, %c0_19] : memref<8x128xf32, #tpu.memory_space<vmem>>, vector<8x128xf32>
    tpu.vector_store %arg7[%c0_18, %c0_19], %30 {strides = array<i32>} : memref<8x128xf32, #tpu.memory_space<vmem>>, vector<8x128xf32>,
    return
  }
}

</mosaic_0001>

<llo_original>
// kernel: tpu_custom_call.1
$region0: #{tpu_custom_call.1}
  #allocation0 [shape = 'u32[]', space=smem, size = 0x4, offset = 0x4, fixed_abs, tag = 'smem constant byte address 0x4 - core index']
  #allocation1 [shape = 'u32[72,128]{1,0:T(1,128)}', space=vmem, size = 0x9000, scoped, tag = 'internal scratch']
  %s0 = inlined_call_operand.vmem [shape: f32[8,1], index: 0, kind: input, shape index: {}]
  %s1 = inlined_call_operand.vmem [shape: f32[1,256], index: 1, kind: input, shape index: {}]
  %s2 = inlined_call_operand.hbm [shape: bf16[256,128], index: 2, kind: input, shape index: {}]
  %s3 = inlined_call_operand.hbm [shape: bf16[256,128], index: 3, kind: input, shape index: {}]
  %s4 = inlined_call_operand.vmem [shape: f32[1,128], index: 4, kind: input, shape index: {}]
  %s5 = inlined_call_operand.hbm [shape: bf16[128,128], index: 5, kind: input, shape index: {}]
  %s6 = inlined_call_operand.vmem [shape: f32[1,128], index: 6, kind: input, shape index: {}]
  %s7 = inlined_call_operand.hbm [shape: f32[8,128], index: 7, kind: output, shape index: {}]
  %s8 = sld [smem:[#allocation0]]
  $region50: #{tpu_custom_call.1} parent=0
    _
  %s10 = ssub.s32 1, %s8
  %s11 = scalar_select 0, %s10, %s8
  $region1: #{tpu_custom_call.1} parent=0
    #allocation2 [shape = 'u8[65536]{0}', space=vmem, size = 0x10000, scoped, tag = 'input window, operand 2, single buffered']
    #allocation3 [shape = 's32[1]{0}', space=sflag, size = 0x4, scoped, tag = 'scoped memory for tpu_custom_call.1']
    #allocation4 [shape = 's32[1]{0}', space=sflag, size = 0x4, scoped, tag = 'scoped memory for tpu_custom_call.1']
    #allocation5 [shape = 'u8[65536]{0}', space=vmem, size = 0x10000, scoped, tag = 'input window, operand 3, single buffered']
    #allocation6 [shape = 's32[1]{0}', space=sflag, size = 0x4, scoped, tag = 'scoped memory for tpu_custom_call.1']
    #allocation7 [shape = 'u8[32768]{0}', space=vmem, size = 0x8000, scoped, tag = 'input window, operand 5, single buffered']
    #allocation8 [shape = 'u8[4096]{0}', space=vmem, size = 0x1000, scoped, tag = 'output window, operand 0, single buffered']
    %12 = vsyncpa [#allocation3], 0
    %13 = vsyncpa [#allocation6], 0
    %14 = vsyncpa [#allocation4], 0
    // Predicated region
    $region2: #{tpu_custom_call.1} parent=1 // pred_check
      _
    $region3: #{tpu_custom_call.1} parent=1 // pred_check_branch
      %16 = sbr.rel (0) target = $region5
    $region4: #{tpu_custom_call.1} parent=1 // pred_region
      _
    $region5: #{tpu_custom_call.1} parent=1 // pred_fallthru
      _
    // Predicated region
    $region6: #{tpu_custom_call.1} parent=1 // pred_check
      _
    $region7: #{tpu_custom_call.1} parent=1 // pred_check_branch
      %18 = sbr.rel (0) target = $region9
    $region8: #{tpu_custom_call.1} parent=1 // pred_region
      _
    $region9: #{tpu_custom_call.1} parent=1 // pred_fallthru
      _
    // Predicated region
    $region10: #{tpu_custom_call.1} parent=1 // pred_check
      _
    $region11: #{tpu_custom_call.1} parent=1 // pred_check_branch
      %20 = sbr.rel (0) target = $region13
    $region12: #{tpu_custom_call.1} parent=1 // pred_region
      %22 = vsyncadd [#allocation3], 0
      %s23 = sshll.u32 %s2, 4
      %s24 = int_to_ptr.hbm [resolvable:$true] %s23
      %s25 = sshll.u32 [#allocation2], 4
      %s26 = int_to_ptr.vmem [resolvable:$true] %s25
      %31 = dma.hbm_to_vmem [thread:$0]  %s24, 2048, %s26, [#allocation3], 64, 64, 4
    $region13: #{tpu_custom_call.1} parent=1 // pred_fallthru
      _
    // Predicated region
    $region14: #{tpu_custom_call.1} parent=1 // pred_check
      _
    $region15: #{tpu_custom_call.1} parent=1 // pred_check_branch
      %33 = sbr.rel (0) target = $region17
    $region16: #{tpu_custom_call.1} parent=1 // pred_region
      %35 = vsyncadd [#allocation6], 0
      %s36 = sshll.u32 %s3, 4
      %s37 = int_to_ptr.hbm [resolvable:$true] %s36
      %s38 = sshll.u32 [#allocation5], 4
      %s39 = int_to_ptr.vmem [resolvable:$true] %s38
      %44 = dma.hbm_to_vmem [thread:$0]  %s37, 2048, %s39, [#allocation6], 64, 64, 4
    $region17: #{tpu_custom_call.1} parent=1 // pred_fallthru
      _
    // Predicated region
    $region18: #{tpu_custom_call.1} parent=1 // pred_check
      _
    $region19: #{tpu_custom_call.1} parent=1 // pred_check_branch
      %46 = sbr.rel (0) target = $region21
    $region20: #{tpu_custom_call.1} parent=1 // pred_region
      _
    $region21: #{tpu_custom_call.1} parent=1 // pred_fallthru
      _
    // Predicated region
    $region22: #{tpu_custom_call.1} parent=1 // pred_check
      _
    $region23: #{tpu_custom_call.1} parent=1 // pred_check_branch
      %48 = sbr.rel (0) target = $region25
    $region24: #{tpu_custom_call.1} parent=1 // pred_region
      %50 = vsyncadd [#allocation6], 0
      %s51 = sshll.u32 %s5, 4
      %s52 = int_to_ptr.hbm [resolvable:$true] %s51
      %s53 = sshll.u32 [#allocation7], 4
      %s54 = int_to_ptr.vmem [resolvable:$true] %s53
      %59 = dma.hbm_to_vmem [thread:$0]  %s52, 1024, %s54, [#allocation6], 64, 64, 4
    $region25: #{tpu_custom_call.1} parent=1 // pred_fallthru
      _
    // Predicated region
    $region26: #{tpu_custom_call.1} parent=1 // pred_check
      _
    $region27: #{tpu_custom_call.1} parent=1 // pred_check_branch
      %61 = sbr.rel (0) target = $region29
    $region28: #{tpu_custom_call.1} parent=1 // pred_region
      _
    $region29: #{tpu_custom_call.1} parent=1 // pred_fallthru
      _
    // Predicated region
    $region30: #{tpu_custom_call.1} parent=1 // pred_check
      _
    $region31: #{tpu_custom_call.1} parent=1 // pred_check_branch
      %63 = sbr.rel (0) target = $region33
    $region32: #{tpu_custom_call.1} parent=1 // pred_region
      %65 = dma.done [#allocation3], 2048
    $region33: #{tpu_custom_call.1} parent=1 // pred_fallthru
      _
    // Predicated region
    $region34: #{tpu_custom_call.1} parent=1 // pred_check
      _
    $region35: #{tpu_custom_call.1} parent=1 // pred_check_branch
      %67 = sbr.rel (0) target = $region37
    $region36: #{tpu_custom_call.1} parent=1 // pred_region
      %69 = dma.done [#allocation6], 2048
    $region37: #{tpu_custom_call.1} parent=1 // pred_fallthru
      _
    // Predicated region
    $region38: #{tpu_custom_call.1} parent=1 // pred_check
      _
    $region39: #{tpu_custom_call.1} parent=1 // pred_check_branch
      %71 = sbr.rel (0) target = $region41
    $region40: #{tpu_custom_call.1} parent=1 // pred_region
      %73 = dma.done [#allocation6], 1024
    $region41: #{tpu_custom_call.1} parent=1 // pred_fallthru
      _
    %v74 = vld [vmem:[%s0] sm:$0xff]
    %v75 = vld [vmem:[%s1] sm:$0x3]
    %77 = vset.pattern.permute.xlu0 0
    %78 = vperm.xlu0 %77, %v74
    %v79 = vpop.permute.xlu0 %78
    %v82 = vperm.slane %v75, 0
    %v83 = vperm.slane %v75, 1
    %v86 = vmul.f32 %v79, %v82
    %v87 = vmul.f32 %v79, %v83
    %v88 = vand.u32 2147483647, %v86
    %vm89 = vcmp.le.f32.partialorder %v88, 0.7853982
    %vm90 = vcmp.lt.s32.totalorder %v86, 0
    %v91 = vand.u32 %v86, 2139095040
    %v92 = vshrl.u32 %v91, 23
    %v93 = vsub.s32 %v92, 127
    %v94 = vand.u32 2147483647, %v86
    %v95 = vand.u32 %v94, 8388607
    %v96 = vor.u32 %v95, 8388608
    %v97 = vsub.s32 0, %v96
    %v98 = vadd.s32 %v93, 1
    %vm99 = vcmp.gt.s32.totalorder %v98, 0
    %v100 = vsel %vm99, %v98, 0
    %v101 = vshrl.u32 %v100, 5
    %v102 = vand.u32 %v100, 31
    %v103 = vsub.s32 32, %v102
    %v104 = vshrl.u32 683565275, %v103
    %v105 = vshll.u32 683565275, %v102
    %v106 = vshrl.u32 2475754826, %v103
    %v107 = vor.u32 %v105, %v106
    %v108 = vshll.u32 2475754826, %v102
    %v109 = vshrl.u32 2131351028, %v103
    %v110 = vor.u32 %v108, %v109
    %v111 = vshll.u32 2131351028, %v102
    %v112 = vshrl.u32 2102212464, %v103
    %v113 = vor.u32 %v111, %v112
    %v114 = vshll.u32 2102212464, %v102
    %v115 = vshrl.u32 920167782, %v103
    %v116 = vor.u32 %v114, %v115
    %v117 = vshll.u32 920167782, %v102
    %v118 = vshrl.u32 1326507024, %v103
    %v119 = vor.u32 %v117, %v118
    %vm120 = vcmp.lt.s32.totalorder %v101, 1
    %vm121 = vcmp.lt.s32.totalorder %v101, 2
    %vm122 = vcmp.lt.s32.totalorder %v101, 3
    %vm123 = vcmp.lt.s32.totalorder %v101, 4
    %v124 = vsel %vm120, %v104, %v107
    %v125 = vsel %vm123, %v113, 2102212464
    %v126 = vsel %vm122, %v110, %v125
    %v127 = vsel %vm121, %v124, %v126
    %v128 = vsel %vm120, %v107, %v110
    %v129 = vsel %vm123, %v116, 920167782
    %v130 = vsel %vm122, %v113, %v129
    %v131 = vsel %vm121, %v128, %v130
    %v132 = vsel %vm120, %v110, %v113
    %v133 = vsel %vm123, %v119, 1326507024
    %v134 = vsel %vm122, %v116, %v133
    %v135 = vsel %vm121, %v132, %v134
    %v136 = vshll.u32 %v96, 8
    %v137 = vand.u32 %v136, 65535
    %v138 = vshrl.u32 %v136, 16
    %v139 = vand.u32 %v135, 65535
    %v140 = vshrl.u32 %v135, 16
    %v141 = vmul.u32 %v137, %v139
    %v142 = vmul.u32 %v137, %v140
    %v143 = vmul.u32 %v138, %v139
    %v144 = vmul.u32 %v138, %v140
    %v145 = vshll.u32 %v142, 16
    %v146 = vshrl.u32 %v142, 16
    %v147 = vshll.u32 %v143, 16
    %v148 = vshrl.u32 %v143, 16
    %vm149 = vc.u32 %v141, %v145
    %v150 = vsel %vm149, 1, 0
    %v151 = vadd.s32 %v141, %v145
    %v152 = vadd.s32 %v144, %v150
    %vm153 = vc.u32 %v151, %v147
    %v154 = vsel %vm153, 1, 0
    %v155 = vadd.s32 %v151, %v147
    %v156 = vadd.s32 %v152, %v154
    %v157 = vadd.s32 %v156, %v146
    %v158 = vadd.s32 %v157, %v148
    %v159 = vand.u32 %v136, 65535
    %v160 = vshrl.u32 %v136, 16
    %v161 = vand.u32 %v131, 65535
    %v162 = vshrl.u32 %v131, 16
    %v163 = vmul.u32 %v159, %v161
    %v164 = vmul.u32 %v159, %v162
    %v165 = vmul.u32 %v160, %v161
    %v166 = vmul.u32 %v160, %v162
    %v167 = vshll.u32 %v164, 16
    %v168 = vshrl.u32 %v164, 16
    %v169 = vshll.u32 %v165, 16
    %v170 = vshrl.u32 %v165, 16
    %vm171 = vc.u32 %v163, %v167
    %v172 = vsel %vm171, 1, 0
    %v173 = vadd.s32 %v163, %v167
    %v174 = vadd.s32 %v166, %v172
    %vm175 = vc.u32 %v173, %v169
    %v176 = vsel %vm175, 1, 0
    %v177 = vadd.s32 %v173, %v169
    %v178 = vadd.s32 %v174, %v176
    %v179 = vadd.s32 %v178, %v168
    %v180 = vadd.s32 %v179, %v170
    %v181 = vmul.u32 %v136, %v127
    %v182 = vadd.s32 %v158, %v177
    %vm183 = vc.u32 %v158, %v177
    %v184 = vadd.s32 %v180, 1
    %v185 = vsel %vm183, %v184, %v180
    %v186 = vadd.s32 %v181, %v185
    %v187 = vadd.s32 %v186, 536870912
    %v188 = vshrl.u32 %v187, 30
    %v189 = vshll.u32 %v188, 30
    %v190 = vsub.s32 %v186, %v189
    %vm191 = vcmp.lt.s32.totalorder %v190, 0
    %v192 = vsub.s32 0, %v190
    %v193 = vsel %vm191, %v192, %v190
    %v194 = vclz %v193
    %v195 = vsub.s32 %v194, 2
    %vm196 = vcmp.gt.s32.totalorder 0, %v195
    %v197 = vsel %vm196, 0, %v195
    %v198 = vsub.s32 32, %v197
    %v199 = vshll.u32 %v190, %v197
    %v200 = vshrl.u32 %v182, %v198
    %v201 = vor.u32 %v199, %v200
    %v202 = vsub.s32 4294967266, %v197
    %v203 = vadd.s32 %v202, 127
    %v204 = vshll.u32 %v203, 23
    %v205 = vor.u32 4788187, %v204
    %v206 = vand.u32 2147483647, %v205
    %v208 = vcvt.s32.f32 %v201
    %v209 = vmul.f32 %v208, %v206
    %v210 = vxor.u32 %v209, 2147483648
    %v211 = vsel %vm90, %v210, %v209
    %v212 = vsub.s32 4, %v188
    %v213 = vsel %vm90, %v212, %v188
    %v214 = vsel %vm89, %v86, %v211
    %v215 = vsel %vm89, 0, %v213
    %v216 = vmul.f32 %v214, %v214
    %v217 = vmul.f32 %v216, -0.001358992
    %v218 = vadd.f32 %v217, 0.041655596
    %v219 = vmul.f32 %v216, %v218
    %v220 = vadd.f32 %v219, -0.4999988
    %v221 = vmul.f32 %v216, %v220
    %v222 = vadd.f32 1.0, %v221
    %v223 = vmul.f32 %v214, %v214
    %v224 = vmul.f32 %v223, -0.00019511016
    %v225 = vadd.f32 %v224, 0.008332121
    %v226 = vmul.f32 %v223, %v225
    %v227 = vadd.f32 %v226, -0.16666654
    %v228 = vmul.f32 %v223, %v227
    %v229 = vadd.f32 %v228, 1.0
    %v230 = vmul.f32 %v229, %v214
    %vm231 = vweird.f32 %v86
    %v232 = vand.u32 %v215, 3
    %vm233 = vcmp.lt.s32.totalorder %v232, 2
    %vm234 = vcmp.eq.s32.totalorder %v232, 0
    %v235 = vxor.u32 %v230, 2147483648
    %v236 = vsel %vm234, %v222, %v235
    %vm237 = vcmp.eq.s32.totalorder %v232, 2
    %v238 = vxor.u32 %v222, 2147483648
    %v239 = vsel %vm237, %v238, %v230
    %v240 = vsel %vm233, %v236, %v239
    %v241 = vsel %vm231, nan, %v240
    %v242 = vand.u32 2147483647, %v87
    %vm243 = vcmp.le.f32.partialorder %v242, 0.7853982
    %vm244 = vcmp.lt.s32.totalorder %v87, 0
    %v245 = vand.u32 %v87, 2139095040
    %v246 = vshrl.u32 %v245, 23
    %v247 = vsub.s32 %v246, 127
    %v248 = vand.u32 2147483647, %v87
    %v249 = vand.u32 %v248, 8388607
    %v250 = vor.u32 %v249, 8388608
    %v251 = vsub.s32 0, %v250
    %v252 = vadd.s32 %v247, 1
    %vm253 = vcmp.gt.s32.totalorder %v252, 0
    %v254 = vsel %vm253, %v252, 0
    %v255 = vshrl.u32 %v254, 5
    %v256 = vand.u32 %v254, 31
    %v257 = vsub.s32 32, %v256
    %v258 = vshrl.u32 683565275, %v257
    %v259 = vshll.u32 683565275, %v256
    %v260 = vshrl.u32 2475754826, %v257
    %v261 = vor.u32 %v259, %v260
    %v262 = vshll.u32 2475754826, %v256
    %v263 = vshrl.u32 2131351028, %v257
    %v264 = vor.u32 %v262, %v263
    %v265 = vshll.u32 2131351028, %v256
    %v266 = vshrl.u32 2102212464, %v257
    %v267 = vor.u32 %v265, %v266
    %v268 = vshll.u32 2102212464, %v256
    %v269 = vshrl.u32 920167782, %v257
    %v270 = vor.u32 %v268, %v269
    %v271 = vshll.u32 920167782, %v256
    %v272 = vshrl.u32 1326507024, %v257
    %v273 = vor.u32 %v271, %v272
    %vm274 = vcmp.lt.s32.totalorder %v255, 1
    %vm275 = vcmp.lt.s32.totalorder %v255, 2
    %vm276 = vcmp.lt.s32.totalorder %v255, 3
    %vm277 = vcmp.lt.s32.totalorder %v255, 4
    %v278 = vsel %vm274, %v258, %v261
    %v279 = vsel %vm277, %v267, 2102212464
    %v280 = vsel %vm276, %v264, %v279
    %v281 = vsel %vm275, %v278, %v280
    %v282 = vsel %vm274, %v261, %v264
    %v283 = vsel %vm277, %v270, 920167782
    %v284 = vsel %vm276, %v267, %v283
    %v285 = vsel %vm275, %v282, %v284
    %v286 = vsel %vm274, %v264, %v267
    %v287 = vsel %vm277, %v273, 1326507024
    %v288 = vsel %vm276, %v270, %v287
    %v289 = vsel %vm275, %v286, %v288
    %v290 = vshll.u32 %v250, 8
    %v291 = vand.u32 %v290, 65535
    %v292 = vshrl.u32 %v290, 16
    %v293 = vand.u32 %v289, 65535
    %v294 = vshrl.u32 %v289, 16
    %v295 = vmul.u32 %v291, %v293
    %v296 = vmul.u32 %v291, %v294
    %v297 = vmul.u32 %v292, %v293
    %v298 = vmul.u32 %v292, %v294
    %v299 = vshll.u32 %v296, 16
    %v300 = vshrl.u32 %v296, 16
    %v301 = vshll.u32 %v297, 16
    %v302 = vshrl.u32 %v297, 16
    %vm303 = vc.u32 %v295, %v299
    %v304 = vsel %vm303, 1, 0
    %v305 = vadd.s32 %v295, %v299
    %v306 = vadd.s32 %v298, %v304
    %vm307 = vc.u32 %v305, %v301
    %v308 = vsel %vm307, 1, 0
    %v309 = vadd.s32 %v305, %v301
    %v310 = vadd.s32 %v306, %v308
    %v311 = vadd.s32 %v310, %v300
    %v312 = vadd.s32 %v311, %v302
    %v313 = vand.u32 %v290, 65535
    %v314 = vshrl.u32 %v290, 16
    %v315 = vand.u32 %v285, 65535
    %v316 = vshrl.u32 %v285, 16
    %v317 = vmul.u32 %v313, %v315
    %v318 = vmul.u32 %v313, %v316
    %v319 = vmul.u32 %v314, %v315
    %v320 = vmul.u32 %v314, %v316
    %v321 = vshll.u32 %v318, 16
    %v322 = vshrl.u32 %v318, 16
    %v323 = vshll.u32 %v319, 16
    %v324 = vshrl.u32 %v319, 16
    %vm325 = vc.u32 %v317, %v321
    %v326 = vsel %vm325, 1, 0
    %v327 = vadd.s32 %v317, %v321
    %v328 = vadd.s32 %v320, %v326
    %vm329 = vc.u32 %v327, %v323
    %v330 = vsel %vm329, 1, 0
    %v331 = vadd.s32 %v327, %v323
    %v332 = vadd.s32 %v328, %v330
    %v333 = vadd.s32 %v332, %v322
    %v334 = vadd.s32 %v333, %v324
    %v335 = vmul.u32 %v290, %v281
    %v336 = vadd.s32 %v312, %v331
    %vm337 = vc.u32 %v312, %v331
    %v338 = vadd.s32 %v334, 1
    %v339 = vsel %vm337, %v338, %v334
    %v340 = vadd.s32 %v335, %v339
    %v341 = vadd.s32 %v340, 536870912
    %v342 = vshrl.u32 %v341, 30
    %v343 = vshll.u32 %v342, 30
    %v344 = vsub.s32 %v340, %v343
    %vm345 = vcmp.lt.s32.totalorder %v344, 0
    %v346 = vsub.s32 0, %v344
    %v347 = vsel %vm345, %v346, %v344
    %v348 = vclz %v347
    %v349 = vsub.s32 %v348, 2
    %vm350 = vcmp.gt.s32.totalorder 0, %v349
    %v351 = vsel %vm350, 0, %v349
    %v352 = vsub.s32 32, %v351
    %v353 = vshll.u32 %v344, %v351
    %v354 = vshrl.u32 %v336, %v352
    %v355 = vor.u32 %v353, %v354
    %v356 = vsub.s32 4294967266, %v351
    %v357 = vadd.s32 %v356, 127
    %v358 = vshll.u32 %v357, 23
    %v359 = vor.u32 4788187, %v358
    %v360 = vand.u32 2147483647, %v359
    %v362 = vcvt.s32.f32 %v355
    %v363 = vmul.f32 %v362, %v360
    %v364 = vxor.u32 %v363, 2147483648
    %v365 = vsel %vm244, %v364, %v363
    %v366 = vsub.s32 4, %v342
    %v367 = vsel %vm244, %v366, %v342
    %v368 = vsel %vm243, %v87, %v365
    %v369 = vsel %vm243, 0, %v367
    %v370 = vmul.f32 %v368, %v368
    %v371 = vmul.f32 %v370, -0.001358992
    %v372 = vadd.f32 %v371, 0.041655596
    %v373 = vmul.f32 %v370, %v372
    %v374 = vadd.f32 %v373, -0.4999988
    %v375 = vmul.f32 %v370, %v374
    %v376 = vadd.f32 1.0, %v375
    %v377 = vmul.f32 %v368, %v368
    %v378 = vmul.f32 %v377, -0.00019511016
    %v379 = vadd.f32 %v378, 0.008332121
    %v380 = vmul.f32 %v377, %v379
    %v381 = vadd.f32 %v380, -0.16666654
    %v382 = vmul.f32 %v377, %v381
    %v383 = vadd.f32 %v382, 1.0
    %v384 = vmul.f32 %v383, %v368
    %vm385 = vweird.f32 %v87
    %v386 = vand.u32 %v369, 3
    %vm387 = vcmp.lt.s32.totalorder %v386, 2
    %vm388 = vcmp.eq.s32.totalorder %v386, 0
    %v389 = vxor.u32 %v384, 2147483648
    %v390 = vsel %vm388, %v376, %v389
    %vm391 = vcmp.eq.s32.totalorder %v386, 2
    %v392 = vxor.u32 %v376, 2147483648
    %v393 = vsel %vm391, %v392, %v384
    %v394 = vsel %vm387, %v390, %v393
    %v395 = vsel %vm385, nan, %v394
    %v396 = vpack.c.bf16 %v241, %v241
    %v397 = vpack.c.bf16 %v395, %v395
    %v398 = vand.u32 2147483647, %v86
    %vm399 = vcmp.le.f32.partialorder %v398, 0.7853982
    %vm400 = vcmp.lt.s32.totalorder %v86, 0
    %v401 = vand.u32 %v86, 2139095040
    %v402 = vshrl.u32 %v401, 23
    %v403 = vsub.s32 %v402, 127
    %v404 = vand.u32 2147483647, %v86
    %v405 = vand.u32 %v404, 8388607
    %v406 = vor.u32 %v405, 8388608
    %v407 = vsub.s32 0, %v406
    %v408 = vadd.s32 %v403, 1
    %vm409 = vcmp.gt.s32.totalorder %v408, 0
    %v410 = vsel %vm409, %v408, 0
    %v411 = vshrl.u32 %v410, 5
    %v412 = vand.u32 %v410, 31
    %v413 = vsub.s32 32, %v412
    %v414 = vshrl.u32 683565275, %v413
    %v415 = vshll.u32 683565275, %v412
    %v416 = vshrl.u32 2475754826, %v413
    %v417 = vor.u32 %v415, %v416
    %v418 = vshll.u32 2475754826, %v412
    %v419 = vshrl.u32 2131351028, %v413
    %v420 = vor.u32 %v418, %v419
    %v421 = vshll.u32 2131351028, %v412
    %v422 = vshrl.u32 2102212464, %v413
    %v423 = vor.u32 %v421, %v422
    %v424 = vshll.u32 2102212464, %v412
    %v425 = vshrl.u32 920167782, %v413
    %v426 = vor.u32 %v424, %v425
    %v427 = vshll.u32 920167782, %v412
    %v428 = vshrl.u32 1326507024, %v413
    %v429 = vor.u32 %v427, %v428
    %vm430 = vcmp.lt.s32.totalorder %v411, 1
    %vm431 = vcmp.lt.s32.totalorder %v411, 2
    %vm432 = vcmp.lt.s32.totalorder %v411, 3
    %vm433 = vcmp.lt.s32.totalorder %v411, 4
    %v434 = vsel %vm430, %v414, %v417
    %v435 = vsel %vm433, %v423, 2102212464
    %v436 = vsel %vm432, %v420, %v435
    %v437 = vsel %vm431, %v434, %v436
    %v438 = vsel %vm430, %v417, %v420
    %v439 = vsel %vm433, %v426, 920167782
    %v440 = vsel %vm432, %v423, %v439
    %v441 = vsel %vm431, %v438, %v440
    %v442 = vsel %vm430, %v420, %v423
    %v443 = vsel %vm433, %v429, 1326507024
    %v444 = vsel %vm432, %v426, %v443
    %v445 = vsel %vm431, %v442, %v444
    %v446 = vshll.u32 %v406, 8
    %v447 = vand.u32 %v446, 65535
    %v448 = vshrl.u32 %v446, 16
    %v449 = vand.u32 %v445, 65535
    %v450 = vshrl.u32 %v445, 16
    %v451 = vmul.u32 %v447, %v449
    %v452 = vmul.u32 %v447, %v450
    %v453 = vmul.u32 %v448, %v449
    %v454 = vmul.u32 %v448, %v450
    %v455 = vshll.u32 %v452, 16
    %v456 = vshrl.u32 %v452, 16
    %v457 = vshll.u32 %v453, 16
    %v458 = vshrl.u32 %v453, 16
    %vm459 = vc.u32 %v451, %v455
    %v460 = vsel %vm459, 1, 0
    %v461 = vadd.s32 %v451, %v455
    %v462 = vadd.s32 %v454, %v460
    %vm463 = vc.u32 %v461, %v457
    %v464 = vsel %vm463, 1, 0
    %v465 = vadd.s32 %v461, %v457
    %v466 = vadd.s32 %v462, %v464
    %v467 = vadd.s32 %v466, %v456
    %v468 = vadd.s32 %v467, %v458
    %v469 = vand.u32 %v446, 65535
    %v470 = vshrl.u32 %v446, 16
    %v471 = vand.u32 %v441, 65535
    %v472 = vshrl.u32 %v441, 16
    %v473 = vmul.u32 %v469, %v471
    %v474 = vmul.u32 %v469, %v472
    %v475 = vmul.u32 %v470, %v471
    %v476 = vmul.u32 %v470, %v472
    %v477 = vshll.u32 %v474, 16
    %v478 = vshrl.u32 %v474, 16
    %v479 = vshll.u32 %v475, 16
    %v480 = vshrl.u32 %v475, 16
    %vm481 = vc.u32 %v473, %v477
    %v482 = vsel %vm481, 1, 0
    %v483 = vadd.s32 %v473, %v477
    %v484 = vadd.s32 %v476, %v482
    %vm485 = vc.u32 %v483, %v479
    %v486 = vsel %vm485, 1, 0
    %v487 = vadd.s32 %v483, %v479
    %v488 = vadd.s32 %v484, %v486
    %v489 = vadd.s32 %v488, %v478
    %v490 = vadd.s32 %v489, %v480
    %v491 = vmul.u32 %v446, %v437
    %v492 = vadd.s32 %v468, %v487
    %vm493 = vc.u32 %v468, %v487
    %v494 = vadd.s32 %v490, 1
    %v495 = vsel %vm493, %v494, %v490
    %v496 = vadd.s32 %v491, %v495
    %v497 = vadd.s32 %v496, 536870912
    %v498 = vshrl.u32 %v497, 30
    %v499 = vshll.u32 %v498, 30
    %v500 = vsub.s32 %v496, %v499
    %vm501 = vcmp.lt.s32.totalorder %v500, 0
    %v502 = vsub.s32 0, %v500
    %v503 = vsel %vm501, %v502, %v500
    %v504 = vclz %v503
    %v505 = vsub.s32 %v504, 2
    %vm506 = vcmp.gt.s32.totalorder 0, %v505
    %v507 = vsel %vm506, 0, %v505
    %v508 = vsub.s32 32, %v507
    %v509 = vshll.u32 %v500, %v507
    %v510 = vshrl.u32 %v492, %v508
    %v511 = vor.u32 %v509, %v510
    %v512 = vsub.s32 4294967266, %v507
    %v513 = vadd.s32 %v512, 127
    %v514 = vshll.u32 %v513, 23
    %v515 = vor.u32 4788187, %v514
    %v516 = vand.u32 2147483647, %v515
    %v518 = vcvt.s32.f32 %v511
    %v519 = vmul.f32 %v518, %v516
    %v520 = vxor.u32 %v519, 2147483648
    %v521 = vsel %vm400, %v520, %v519
    %v522 = vsub.s32 4, %v498
    %v523 = vsel %vm400, %v522, %v498
    %v524 = vsel %vm399, %v86, %v521
    %v525 = vsel %vm399, 0, %v523
    %v526 = vmul.f32 %v524, %v524
    %v527 = vmul.f32 %v526, -0.001358992
    %v528 = vadd.f32 %v527, 0.041655596
    %v529 = vmul.f32 %v526, %v528
    %v530 = vadd.f32 %v529, -0.4999988
    %v531 = vmul.f32 %v526, %v530
    %v532 = vadd.f32 1.0, %v531
    %v533 = vmul.f32 %v524, %v524
    %v534 = vmul.f32 %v533, -0.00019511016
    %v535 = vadd.f32 %v534, 0.008332121
    %v536 = vmul.f32 %v533, %v535
    %v537 = vadd.f32 %v536, -0.16666654
    %v538 = vmul.f32 %v533, %v537
    %v539 = vadd.f32 %v538, 1.0
    %v540 = vmul.f32 %v539, %v524
    %vm541 = vweird.f32 %v86
    %v542 = vadd.s32 %v525, 3
    %v543 = vand.u32 %v542, 3
    %vm544 = vcmp.lt.s32.totalorder %v543, 2
    %vm545 = vcmp.eq.s32.totalorder %v543, 0
    %v546 = vxor.u32 %v540, 2147483648
    %v547 = vsel %vm545, %v532, %v546
    %vm548 = vcmp.eq.s32.totalorder %v543, 2
    %v549 = vxor.u32 %v532, 2147483648
    %v550 = vsel %vm548, %v549, %v540
    %v551 = vsel %vm544, %v547, %v550
    %v552 = vsel %vm541, nan, %v551
    %v553 = vand.u32 2147483647, %v87
    %vm554 = vcmp.le.f32.partialorder %v553, 0.7853982
    %vm555 = vcmp.lt.s32.totalorder %v87, 0
    %v556 = vand.u32 %v87, 2139095040
    %v557 = vshrl.u32 %v556, 23
    %v558 = vsub.s32 %v557, 127
    %v559 = vand.u32 2147483647, %v87
    %v560 = vand.u32 %v559, 8388607
    %v561 = vor.u32 %v560, 8388608
    %v562 = vsub.s32 0, %v561
    %v563 = vadd.s32 %v558, 1
    %vm564 = vcmp.gt.s32.totalorder %v563, 0
    %v565 = vsel %vm564, %v563, 0
    %v566 = vshrl.u32 %v565, 5
    %v567 = vand.u32 %v565, 31
    %v568 = vsub.s32 32, %v567
    %v569 = vshrl.u32 683565275, %v568
    %v570 = vshll.u32 683565275, %v567
    %v571 = vshrl.u32 2475754826, %v568
    %v572 = vor.u32 %v570, %v571
    %v573 = vshll.u32 2475754826, %v567
    %v574 = vshrl.u32 2131351028, %v568
    %v575 = vor.u32 %v573, %v574
    %v576 = vshll.u32 2131351028, %v567
    %v577 = vshrl.u32 2102212464, %v568
    %v578 = vor.u32 %v576, %v577
    %v579 = vshll.u32 2102212464, %v567
    %v580 = vshrl.u32 920167782, %v568
    %v581 = vor.u32 %v579, %v580
    %v582 = vshll.u32 920167782, %v567
    %v583 = vshrl.u32 1326507024, %v568
    %v584 = vor.u32 %v582, %v583
    %vm585 = vcmp.lt.s32.totalorder %v566, 1
    %vm586 = vcmp.lt.s32.totalorder %v566, 2
    %vm587 = vcmp.lt.s32.totalorder %v566, 3
    %vm588 = vcmp.lt.s32.totalorder %v566, 4
    %v589 = vsel %vm585, %v569, %v572
    %v590 = vsel %vm588, %v578, 2102212464
    %v591 = vsel %vm587, %v575, %v590
    %v592 = vsel %vm586, %v589, %v591
    %v593 = vsel %vm585, %v572, %v575
    %v594 = vsel %vm588, %v581, 920167782
    %v595 = vsel %vm587, %v578, %v594
    %v596 = vsel %vm586, %v593, %v595
    %v597 = vsel %vm585, %v575, %v578
    %v598 = vsel %vm588, %v584, 1326507024
    %v599 = vsel %vm587, %v581, %v598
    %v600 = vsel %vm586, %v597, %v599
    %v601 = vshll.u32 %v561, 8
    %v602 = vand.u32 %v601, 65535
    %v603 = vshrl.u32 %v601, 16
    %v604 = vand.u32 %v600, 65535
    %v605 = vshrl.u32 %v600, 16
    %v606 = vmul.u32 %v602, %v604
    %v607 = vmul.u32 %v602, %v605
    %v608 = vmul.u32 %v603, %v604
    %v609 = vmul.u32 %v603, %v605
    %v610 = vshll.u32 %v607, 16
    %v611 = vshrl.u32 %v607, 16
    %v612 = vshll.u32 %v608, 16
    %v613 = vshrl.u32 %v608, 16
    %vm614 = vc.u32 %v606, %v610
    %v615 = vsel %vm614, 1, 0
    %v616 = vadd.s32 %v606, %v610
    %v617 = vadd.s32 %v609, %v615
    %vm618 = vc.u32 %v616, %v612
    %v619 = vsel %vm618, 1, 0
    %v620 = vadd.s32 %v616, %v612
    %v621 = vadd.s32 %v617, %v619
    %v622 = vadd.s32 %v621, %v611
    %v623 = vadd.s32 %v622, %v613
    %v624 = vand.u32 %v601, 65535
    %v625 = vshrl.u32 %v601, 16
    %v626 = vand.u32 %v596, 65535
    %v627 = vshrl.u32 %v596, 16
    %v628 = vmul.u32 %v624, %v626
    %v629 = vmul.u32 %v624, %v627
    %v630 = vmul.u32 %v625, %v626
    %v631 = vmul.u32 %v625, %v627
    %v632 = vshll.u32 %v629, 16
    %v633 = vshrl.u32 %v629, 16
    %v634 = vshll.u32 %v630, 16
    %v635 = vshrl.u32 %v630, 16
    %vm636 = vc.u32 %v628, %v632
    %v637 = vsel %vm636, 1, 0
    %v638 = vadd.s32 %v628, %v632
    %v639 = vadd.s32 %v631, %v637
    %vm640 = vc.u32 %v638, %v634
    %v641 = vsel %vm640, 1, 0
    %v642 = vadd.s32 %v638, %v634
    %v643 = vadd.s32 %v639, %v641
    %v644 = vadd.s32 %v643, %v633
    %v645 = vadd.s32 %v644, %v635
    %v646 = vmul.u32 %v601, %v592
    %v647 = vadd.s32 %v623, %v642
    %vm648 = vc.u32 %v623, %v642
    %v649 = vadd.s32 %v645, 1
    %v650 = vsel %vm648, %v649, %v645
    %v651 = vadd.s32 %v646, %v650
    %v652 = vadd.s32 %v651, 536870912
    %v653 = vshrl.u32 %v652, 30
    %v654 = vshll.u32 %v653, 30
    %v655 = vsub.s32 %v651, %v654
    %vm656 = vcmp.lt.s32.totalorder %v655, 0
    %v657 = vsub.s32 0, %v655
    %v658 = vsel %vm656, %v657, %v655
    %v659 = vclz %v658
    %v660 = vsub.s32 %v659, 2
    %vm661 = vcmp.gt.s32.totalorder 0, %v660
    %v662 = vsel %vm661, 0, %v660
    %v663 = vsub.s32 32, %v662
    %v664 = vshll.u32 %v655, %v662
    %v665 = vshrl.u32 %v647, %v663
    %v666 = vor.u32 %v664, %v665
    %v667 = vsub.s32 4294967266, %v662
    %v668 = vadd.s32 %v667, 127
    %v669 = vshll.u32 %v668, 23
    %v670 = vor.u32 4788187, %v669
    %v671 = vand.u32 2147483647, %v670
    %v673 = vcvt.s32.f32 %v666
    %v674 = vmul.f32 %v673, %v671
    %v675 = vxor.u32 %v674, 2147483648
    %v676 = vsel %vm555, %v675, %v674
    %v677 = vsub.s32 4, %v653
    %v678 = vsel %vm555, %v677, %v653
    %v679 = vsel %vm554, %v87, %v676
    %v680 = vsel %vm554, 0, %v678
    %v681 = vmul.f32 %v679, %v679
    %v682 = vmul.f32 %v681, -0.001358992
    %v683 = vadd.f32 %v682, 0.041655596
    %v684 = vmul.f32 %v681, %v683
    %v685 = vadd.f32 %v684, -0.4999988
    %v686 = vmul.f32 %v681, %v685
    %v687 = vadd.f32 1.0, %v686
    %v688 = vmul.f32 %v679, %v679
    %v689 = vmul.f32 %v688, -0.00019511016
    %v690 = vadd.f32 %v689, 0.008332121
    %v691 = vmul.f32 %v688, %v690
    %v692 = vadd.f32 %v691, -0.16666654
    %v693 = vmul.f32 %v688, %v692
    %v694 = vadd.f32 %v693, 1.0
    %v695 = vmul.f32 %v694, %v679
    %vm696 = vweird.f32 %v87
    %v697 = vadd.s32 %v680, 3
    %v698 = vand.u32 %v697, 3
    %vm699 = vcmp.lt.s32.totalorder %v698, 2
    %vm700 = vcmp.eq.s32.totalorder %v698, 0
    %v701 = vxor.u32 %v695, 2147483648
    %v702 = vsel %vm700, %v687, %v701
    %vm703 = vcmp.eq.s32.totalorder %v698, 2
    %v704 = vxor.u32 %v687, 2147483648
    %v705 = vsel %vm703, %v704, %v695
    %v706 = vsel %vm699, %v702, %v705
    %v707 = vsel %vm696, nan, %v706
    %v708 = vpack.c.bf16 %v552, %v552
    %v709 = vpack.c.bf16 %v707, %v707
    %v710 = vld [vmem:[#allocation2] sm:$0xf]
    %v711 = vld [vmem:[#allocation2 + $0x4] sm:$0xf]
    %v712 = vld [vmem:[#allocation2 + $0x8] sm:$0xf]
    %v713 = vld [vmem:[#allocation2 + $0xc] sm:$0xf]
    %v714 = vld [vmem:[#allocation2 + $0x10] sm:$0xf]
    %v715 = vld [vmem:[#allocation2 + $0x14] sm:$0xf]
    %v716 = vld [vmem:[#allocation2 + $0x18] sm:$0xf]
    %v717 = vld [vmem:[#allocation2 + $0x1c] sm:$0xf]
    %v718 = vld [vmem:[#allocation2 + $0x20] sm:$0xf]
    %v719 = vld [vmem:[#allocation2 + $0x24] sm:$0xf]
    %v720 = vld [vmem:[#allocation2 + $0x28] sm:$0xf]
    %v721 = vld [vmem:[#allocation2 + $0x2c] sm:$0xf]
    %v722 = vld [vmem:[#allocation2 + $0x30] sm:$0xf]
    %v723 = vld [vmem:[#allocation2 + $0x34] sm:$0xf]
    %v724 = vld [vmem:[#allocation2 + $0x38] sm:$0xf]
    %v725 = vld [vmem:[#allocation2 + $0x3c] sm:$0xf]
    %v726 = vld [vmem:[#allocation2 + $0x40] sm:$0xf]
    %v727 = vld [vmem:[#allocation2 + $0x44] sm:$0xf]
    %v728 = vld [vmem:[#allocation2 + $0x48] sm:$0xf]
    %v729 = vld [vmem:[#allocation2 + $0x4c] sm:$0xf]
    %v730 = vld [vmem:[#allocation2 + $0x50] sm:$0xf]
    %v731 = vld [vmem:[#allocation2 + $0x54] sm:$0xf]
    %v732 = vld [vmem:[#allocation2 + $0x58] sm:$0xf]
    %v733 = vld [vmem:[#allocation2 + $0x5c] sm:$0xf]
    %v734 = vld [vmem:[#allocation2 + $0x60] sm:$0xf]
    %v735 = vld [vmem:[#allocation2 + $0x64] sm:$0xf]
    %v736 = vld [vmem:[#allocation2 + $0x68] sm:$0xf]
    %v737 = vld [vmem:[#allocation2 + $0x6c] sm:$0xf]
    %v738 = vld [vmem:[#allocation2 + $0x70] sm:$0xf]
    %v739 = vld [vmem:[#allocation2 + $0x74] sm:$0xf]
    %v740 = vld [vmem:[#allocation2 + $0x78] sm:$0xf]
    %v741 = vld [vmem:[#allocation2 + $0x7c] sm:$0xf]
    %v742 = vld [vmem:[#allocation5] sm:$0xf]
    %v743 = vld [vmem:[#allocation5 + $0x4] sm:$0xf]
    %v744 = vld [vmem:[#allocation5 + $0x8] sm:$0xf]
    %v745 = vld [vmem:[#allocation5 + $0xc] sm:$0xf]
    %v746 = vld [vmem:[#allocation5 + $0x10] sm:$0xf]
    %v747 = vld [vmem:[#allocation5 + $0x14] sm:$0xf]
    %v748 = vld [vmem:[#allocation5 + $0x18] sm:$0xf]
    %v749 = vld [vmem:[#allocation5 + $0x1c] sm:$0xf]
    %v750 = vld [vmem:[#allocation5 + $0x20] sm:$0xf]
    %v751 = vld [vmem:[#allocation5 + $0x24] sm:$0xf]
    %v752 = vld [vmem:[#allocation5 + $0x28] sm:$0xf]
    %v753 = vld [vmem:[#allocation5 + $0x2c] sm:$0xf]
    %v754 = vld [vmem:[#allocation5 + $0x30] sm:$0xf]
    %v755 = vld [vmem:[#allocation5 + $0x34] sm:$0xf]
    %v756 = vld [vmem:[#allocation5 + $0x38] sm:$0xf]
    %v757 = vld [vmem:[#allocation5 + $0x3c] sm:$0xf]
    %v758 = vld [vmem:[#allocation5 + $0x40] sm:$0xf]
    %v759 = vld [vmem:[#allocation5 + $0x44] sm:$0xf]
    %v760 = vld [vmem:[#allocation5 + $0x48] sm:$0xf]
    %v761 = vld [vmem:[#allocation5 + $0x4c] sm:$0xf]
    %v762 = vld [vmem:[#allocation5 + $0x50] sm:$0xf]
    %v763 = vld [vmem:[#allocation5 + $0x54] sm:$0xf]
    %v764 = vld [vmem:[#allocation5 + $0x58] sm:$0xf]
    %v765 = vld [vmem:[#allocation5 + $0x5c] sm:$0xf]
    %v766 = vld [vmem:[#allocation5 + $0x60] sm:$0xf]
    %v767 = vld [vmem:[#allocation5 + $0x64] sm:$0xf]
    %v768 = vld [vmem:[#allocation5 + $0x68] sm:$0xf]
    %v769 = vld [vmem:[#allocation5 + $0x6c] sm:$0xf]
    %v770 = vld [vmem:[#allocation5 + $0x70] sm:$0xf]
    %v771 = vld [vmem:[#allocation5 + $0x74] sm:$0xf]
    %v772 = vld [vmem:[#allocation5 + $0x78] sm:$0xf]
    %v773 = vld [vmem:[#allocation5 + $0x7c] sm:$0xf]
    %v806 = vunpack.c.l.b16 %v742
    %v807 = vunpack.c.l.b16 %v743
    %v808 = vunpack.c.l.b16 %v744
    %v809 = vunpack.c.l.b16 %v745
    %v810 = vunpack.c.l.b16 %v746
    %v811 = vunpack.c.l.b16 %v747
    %v812 = vunpack.c.l.b16 %v748
    %v813 = vunpack.c.l.b16 %v749
    %v814 = vunpack.c.l.b16 %v750
    %v815 = vunpack.c.l.b16 %v751
    %v816 = vunpack.c.l.b16 %v752
    %v817 = vunpack.c.l.b16 %v753
    %v818 = vunpack.c.l.b16 %v754
    %v819 = vunpack.c.l.b16 %v755
    %v820 = vunpack.c.l.b16 %v756
    %v821 = vunpack.c.l.b16 %v757
    %v822 = vunpack.c.l.b16 %v758
    %v823 = vunpack.c.l.b16 %v759
    %v824 = vunpack.c.l.b16 %v760
    %v825 = vunpack.c.l.b16 %v761
    %v826 = vunpack.c.l.b16 %v762
    %v827 = vunpack.c.l.b16 %v763
    %v828 = vunpack.c.l.b16 %v764
    %v829 = vunpack.c.l.b16 %v765
    %v830 = vunpack.c.l.b16 %v766
    %v831 = vunpack.c.l.b16 %v767
    %v832 = vunpack.c.l.b16 %v768
    %v833 = vunpack.c.l.b16 %v769
    %v834 = vunpack.c.l.b16 %v770
    %v835 = vunpack.c.l.b16 %v771
    %v836 = vunpack.c.l.b16 %v772
    %v837 = vunpack.c.l.b16 %v773
    %v838 = vpack.c.b16 %v807, %v806
    %v839 = vpack.c.b16 %v809, %v808
    %v840 = vpack.c.b16 %v811, %v810
    %v841 = vpack.c.b16 %v813, %v812
    %v842 = vpack.c.b16 %v815, %v814
    %v843 = vpack.c.b16 %v817, %v816
    %v844 = vpack.c.b16 %v819, %v818
    %v845 = vpack.c.b16 %v821, %v820
    %v846 = vpack.c.b16 %v823, %v822
    %v847 = vpack.c.b16 %v825, %v824
    %v848 = vpack.c.b16 %v827, %v826
    %v849 = vpack.c.b16 %v829, %v828
    %v850 = vpack.c.b16 %v831, %v830
    %v851 = vpack.c.b16 %v833, %v832
    %v852 = vpack.c.b16 %v835, %v834
    %v853 = vpack.c.b16 %v837, %v836
    %870 = vmatpush.bf16.msra.mxu0 %v845
    %871 = vmatpush.bf16.msra.mxu0 %v844
    %872 = vmatpush.bf16.msra.mxu0 %v843
    %873 = vmatpush.bf16.msra.mxu0 %v842
    %874 = vmatpush.bf16.msra.mxu0 %v841
    %875 = vmatpush.bf16.msra.mxu0 %v840
    %876 = vmatpush.bf16.msra.mxu0 %v839
    %877 = vmatpush.bf16.msra.mxu0 %v838
    %878 = vmatmul.bf16.gmra.mxu0 %v708
    %v879 = vpop.f32.mrf.mxu0
    %v880 = vadd.f32 0.0, %v879
    %v881 = vpop.f32.mrf.mxu0
    %882 = vdwg.mxu0
    %883 = vmatpush.bf16.msra.mxu0 %v853
    %884 = vmatpush.bf16.msra.mxu0 %v852
    %885 = vmatpush.bf16.msra.mxu0 %v851
    %886 = vmatpush.bf16.msra.mxu0 %v850
    %887 = vmatpush.bf16.msra.mxu0 %v849
    %888 = vmatpush.bf16.msra.mxu0 %v848
    %889 = vmatpush.bf16.msra.mxu0 %v847
    %890 = vmatpush.bf16.msra.mxu0 %v846
    %891 = vmatmul.bf16.gmra.mxu0 %v709
    %v892 = vpop.f32.mrf.mxu0
    %v893 = vadd.f32 %v880, %v892
    %v894 = vpop.f32.mrf.mxu0
    %895 = vdwg.mxu0
    %v928 = vunpack.c.l.b16 %v710
    %v929 = vunpack.c.l.b16 %v711
    %v930 = vunpack.c.l.b16 %v712
    %v931 = vunpack.c.l.b16 %v713
    %v932 = vunpack.c.l.b16 %v714
    %v933 = vunpack.c.l.b16 %v715
    %v934 = vunpack.c.l.b16 %v716
    %v935 = vunpack.c.l.b16 %v717
    %v936 = vunpack.c.l.b16 %v718
    %v937 = vunpack.c.l.b16 %v719
    %v938 = vunpack.c.l.b16 %v720
    %v939 = vunpack.c.l.b16 %v721
    %v940 = vunpack.c.l.b16 %v722
    %v941 = vunpack.c.l.b16 %v723
    %v942 = vunpack.c.l.b16 %v724
    %v943 = vunpack.c.l.b16 %v725
    %v944 = vunpack.c.l.b16 %v726
    %v945 = vunpack.c.l.b16 %v727
    %v946 = vunpack.c.l.b16 %v728
    %v947 = vunpack.c.l.b16 %v729
    %v948 = vunpack.c.l.b16 %v730
    %v949 = vunpack.c.l.b16 %v731
    %v950 = vunpack.c.l.b16 %v732
    %v951 = vunpack.c.l.b16 %v733
    %v952 = vunpack.c.l.b16 %v734
    %v953 = vunpack.c.l.b16 %v735
    %v954 = vunpack.c.l.b16 %v736
    %v955 = vunpack.c.l.b16 %v737
    %v956 = vunpack.c.l.b16 %v738
    %v957 = vunpack.c.l.b16 %v739
    %v958 = vunpack.c.l.b16 %v740
    %v959 = vunpack.c.l.b16 %v741
    %v960 = vpack.c.b16 %v929, %v928
    %v961 = vpack.c.b16 %v931, %v930
    %v962 = vpack.c.b16 %v933, %v932
    %v963 = vpack.c.b16 %v935, %v934
    %v964 = vpack.c.b16 %v937, %v936
    %v965 = vpack.c.b16 %v939, %v938
    %v966 = vpack.c.b16 %v941, %v940
    %v967 = vpack.c.b16 %v943, %v942
    %v968 = vpack.c.b16 %v945, %v944
    %v969 = vpack.c.b16 %v947, %v946
    %v970 = vpack.c.b16 %v949, %v948
    %v971 = vpack.c.b16 %v951, %v950
    %v972 = vpack.c.b16 %v953, %v952
    %v973 = vpack.c.b16 %v955, %v954
    %v974 = vpack.c.b16 %v957, %v956
    %v975 = vpack.c.b16 %v959, %v958
    %992 = vmatpush.bf16.msra.mxu0 %v967
    %993 = vmatpush.bf16.msra.mxu0 %v966
    %994 = vmatpush.bf16.msra.mxu0 %v965
    %995 = vmatpush.bf16.msra.mxu0 %v964
    %996 = vmatpush.bf16.msra.mxu0 %v963
    %997 = vmatpush.bf16.msra.mxu0 %v962
    %998 = vmatpush.bf16.msra.mxu0 %v961
    %999 = vmatpush.bf16.msra.mxu0 %v960
    %1000 = vmatmul.bf16.gmra.mxu0 %v396
    %v1001 = vpop.f32.mrf.mxu0
    %v1002 = vadd.f32 %v893, %v1001
    %v1003 = vpop.f32.mrf.mxu0
    %1004 = vdwg.mxu0
    %1005 = vmatpush.bf16.msra.mxu0 %v975
    %1006 = vmatpush.bf16.msra.mxu0 %v974
    %1007 = vmatpush.bf16.msra.mxu0 %v973
    %1008 = vmatpush.bf16.msra.mxu0 %v972
    %1009 = vmatpush.bf16.msra.mxu0 %v971
    %1010 = vmatpush.bf16.msra.mxu0 %v970
    %1011 = vmatpush.bf16.msra.mxu0 %v969
    %1012 = vmatpush.bf16.msra.mxu0 %v968
    %1013 = vmatmul.bf16.gmra.mxu0 %v397
    %v1014 = vpop.f32.mrf.mxu0
    %v1015 = vadd.f32 %v1002, %v1014
    %v1016 = vpop.f32.mrf.mxu0
    %1017 = vdwg.mxu0
    %v1018 = vld [vmem:[%s4] sm:$0x1]
    %v1020 = vperm.slane %v1018, 0
    %v1022 = vadd.f32 %v1015, %v1020
    %v1023 = vmul.f32 %v1022, 0.5
    %v1024 = vtanh.pop %v1023
    %v1025 = vmul.f32 %v1024, 0.5
    %v1026 = vadd.f32 %v1025, 0.5
    %v1027 = vmul.f32 %v1022, %v1026
    %v1028 = vpack.c.bf16 %v1027, %v1027
    %v1029 = vld [vmem:[#allocation7] sm:$0xf]
    %v1030 = vld [vmem:[#allocation7 + $0x4] sm:$0xf]
    %v1031 = vld [vmem:[#allocation7 + $0x8] sm:$0xf]
    %v1032 = vld [vmem:[#allocation7 + $0xc] sm:$0xf]
    %v1033 = vld [vmem:[#allocation7 + $0x10] sm:$0xf]
    %v1034 = vld [vmem:[#allocation7 + $0x14] sm:$0xf]
    %v1035 = vld [vmem:[#allocation7 + $0x18] sm:$0xf]
    %v1036 = vld [vmem:[#allocation7 + $0x1c] sm:$0xf]
    %v1037 = vld [vmem:[#allocation7 + $0x20] sm:$0xf]
    %v1038 = vld [vmem:[#allocation7 + $0x24] sm:$0xf]
    %v1039 = vld [vmem:[#allocation7 + $0x28] sm:$0xf]
    %v1040 = vld [vmem:[#allocation7 + $0x2c] sm:$0xf]
    %v1041 = vld [vmem:[#allocation7 + $0x30] sm:$0xf]
    %v1042 = vld [vmem:[#allocation7 + $0x34] sm:$0xf]
    %v1043 = vld [vmem:[#allocation7 + $0x38] sm:$0xf]
    %v1044 = vld [vmem:[#allocation7 + $0x3c] sm:$0xf]
    %v1045 = vld [vmem:[%s6] sm:$0x1]
    %v1047 = vperm.slane %v1045, 0
    %v1065 = vunpack.c.l.b16 %v1029
    %v1066 = vunpack.c.l.b16 %v1030
    %v1067 = vunpack.c.l.b16 %v1031
    %v1068 = vunpack.c.l.b16 %v1032
    %v1069 = vunpack.c.l.b16 %v1033
    %v1070 = vunpack.c.l.b16 %v1034
    %v1071 = vunpack.c.l.b16 %v1035
    %v1072 = vunpack.c.l.b16 %v1036
    %v1073 = vunpack.c.l.b16 %v1037
    %v1074 = vunpack.c.l.b16 %v1038
    %v1075 = vunpack.c.l.b16 %v1039
    %v1076 = vunpack.c.l.b16 %v1040
    %v1077 = vunpack.c.l.b16 %v1041
    %v1078 = vunpack.c.l.b16 %v1042
    %v1079 = vunpack.c.l.b16 %v1043
    %v1080 = vunpack.c.l.b16 %v1044
    %v1081 = vpack.c.b16 %v1066, %v1065
    %v1082 = vpack.c.b16 %v1068, %v1067
    %v1083 = vpack.c.b16 %v1070, %v1069
    %v1084 = vpack.c.b16 %v1072, %v1071
    %v1085 = vpack.c.b16 %v1074, %v1073
    %v1086 = vpack.c.b16 %v1076, %v1075
    %v1087 = vpack.c.b16 %v1078, %v1077
    %v1088 = vpack.c.b16 %v1080, %v1079
    %1097 = vmatpush.bf16.msra.mxu0 %v1088
    %1098 = vmatpush.bf16.msra.mxu0 %v1087
    %1099 = vmatpush.bf16.msra.mxu0 %v1086
    %1100 = vmatpush.bf16.msra.mxu0 %v1085
    %1101 = vmatpush.bf16.msra.mxu0 %v1084
    %1102 = vmatpush.bf16.msra.mxu0 %v1083
    %1103 = vmatpush.bf16.msra.mxu0 %v1082
    %1104 = vmatpush.bf16.msra.mxu0 %v1081
    %1105 = vmatmul.bf16.gmra.mxu0 %v1028
    %v1106 = vpop.f32.mrf.mxu0
    %v1107 = vadd.f32 %v1047, %v1106
    %v1108 = vpop.f32.mrf.mxu0
    %1109 = vdwg.mxu0
    %1110 = vst [vmem:[#allocation8] sm:$0xff] %v1107
    // Predicated region
    $region42: #{tpu_custom_call.1} parent=1 // pred_check
      _
    $region43: #{tpu_custom_call.1} parent=1 // pred_check_branch
      %1112 = sbr.rel (0) target = $region45
    $region44: #{tpu_custom_call.1} parent=1 // pred_region
      %1114 = vsyncadd [#allocation4], 0
      %s1116 = sshll.u32 [#allocation8], 4
      %s1117 = int_to_ptr.vmem [resolvable:$true] %s1116
      %s1118 = sshll.u32 %s7, 4
      %s1119 = int_to_ptr.hbm [resolvable:$true] %s1118
      %1121 = dma.vmem_to_hbm [thread:$0]  %s1117, 128, %s1119, [#allocation4]
    $region45: #{tpu_custom_call.1} parent=1 // pred_fallthru
      _
    // Predicated region
    $region46: #{tpu_custom_call.1} parent=1 // pred_check
      _
    $region47: #{tpu_custom_call.1} parent=1 // pred_check_branch
      %1123 = sbr.rel (0) target = $region49
    $region48: #{tpu_custom_call.1} parent=1 // pred_region
      %1125 = dma.done [#allocation4], 128
    $region49: #{tpu_custom_call.1} parent=1 // pred_fallthru
      _
    %1126 = vsyncpa [#allocation3], 1
    %1127 = vsyncpa [#allocation6], 1
    %1128 = vsyncpa [#allocation4], 1

</llo_original>
